<compile_context>
chip_gen: v6e
topology: v6e:2x2x1
jax: 0.10.0
libtpu: 0.0.40
codegen_flags: <defaults>
</compile_context>

<pallas_src>
import functools

import jax
import jax.numpy as jnp
from jax import lax
from jax.experimental import pallas as pl
from jax.experimental.pallas import tpu as pltpu

letter = [c for c in 'SE?abcdefghijklmnopqrstuvwxyz']
n_class = len(letter)        # 29
n_hidden = 128

_B_PAD = 8                   # batch padded to one sublane group
_C_PAD = 32                  # n_class padded (matmul K dim / x lane width)

# Weight-slab row offsets (all sublane-aligned, also 16-aligned for bf16 packing).
_W_IH_ROW = 0                # rows   0: 32  -> padded W_ih   [32, 256] (enc|dec)
_W_HH_ROW = 32               # rows  32:160 -> W_hh           [128,256] (enc|dec)
_W_FC_ROW = 160              # rows 160:288 -> padded W_fc    [128,256] (cols 0:128 used)
_W_SLAB_ROWS = 288


def _seq2seq_kernel(t_enc, t_dec, x_ref, h0_ref, w_ref, b_ref, out_ref):
    """Whole seq2seq forward in one kernel invocation (everything fits VMEM).

    x_ref   : [(t_enc+t_dec)*8, 32] bf16   time-major rows, enc then dec (padded)
    h0_ref  : [8, 128]              f32    padded initial hidden state
    w_ref   : [288, 256]            bf16   packed W_ih | W_hh | W_fc slab
    b_ref   : [8, 256]              f32    row 0 = b_ih+b_hh (enc|dec), row 1 = b_fc (lane-padded)
    out_ref : [t_dec*8, 128]        f32    lane-dense fc output (cols >= 29 are zero)
    """
    f32 = jnp.float32
    bf16 = jnp.bfloat16
    B = _B_PAD

    # Static, aligned views into the packed bf16 weight slab.
    w_ih = w_ref[_W_IH_ROW:_W_IH_ROW + _C_PAD, :]                    # [32, 256]
    w_hh_e = w_ref[_W_HH_ROW:_W_HH_ROW + n_hidden, :n_hidden]        # [128, 128]
    w_hh_d = w_ref[_W_HH_ROW:_W_HH_ROW + n_hidden, n_hidden:]        # [128, 128]
    w_fc = w_ref[_W_FC_ROW:_W_FC_ROW + n_hidden, :n_hidden]          # [128, 128]

    b_ih = b_ref[0:1, :]                      # [1, 256] (enc | dec, b_ih+b_hh folded)
    b_fc = b_ref[1:2, :n_hidden]              # [1, 128] (cols >= n_class are zero)

    # ---- Hoisted input projection: one bf16 matmul covering every timestep of
    # both RNNs; bias added here ONCE.
    pre = (jnp.dot(x_ref[...], w_ih, preferred_element_type=f32)
           + b_ih)                            # [(T_e+T_d)*8, 256] f32
    pre_enc = pre[:, :n_hidden]               # encoder gate inputs
    pre_dec = pre[:, n_hidden:]               # decoder gate inputs

    # ---- Encoder recurrence: fully unrolled, h register-resident (f32 carry,
    # bf16 MXU operand).  Every slice is an aligned 8-row group.
    h = h0_ref[...]                                                  # [8, 128]
    for t in range(t_enc):
        hw = jnp.dot(h.astype(bf16), w_hh_e, preferred_element_type=f32)
        h = jnp.tanh(pre_enc[t * B:(t + 1) * B, :] + hw)

    # ---- Decoder recurrence: collect hidden states so fc is one matmul.
    hs = []
    for t in range(t_dec):
        hw = jnp.dot(h.astype(bf16), w_hh_d, preferred_element_type=f32)
        h = jnp.tanh(pre_dec[(t_enc + t) * B:(t_enc + t + 1) * B, :] + hw)
        hs.append(h)
    h_dec = jnp.concatenate(hs, axis=0)                              # [t_dec*8, 128]

    # ---- Hoisted, lane-dense fc projection: one matmul + one unmasked store.
    out_ref[...] = (jnp.dot(h_dec.astype(bf16), w_fc, preferred_element_type=f32)
                    + b_fc)


def init_params(key):
    """PyTorch-style U(-k, k) init, k = 1/sqrt(n_hidden), plus packed kernel slabs."""
    k = 1.0 / jnp.sqrt(jnp.float32(n_hidden))
    keys = jax.random.split(key, 10)

    def u(key, shape):
        return jax.random.uniform(key, shape, jnp.float32, -k, k)

    # PyTorch shapes: W_ih [n_hidden, n_class], W_hh [n_hidden, n_hidden],
    # fc.weight [n_class, n_hidden].
    w_ih_e = u(keys[0], (n_hidden, n_class))
    w_hh_e = u(keys[1], (n_hidden, n_hidden))
    b_ih_e = u(keys[2], (n_hidden,))
    b_hh_e = u(keys[3], (n_hidden,))
    w_ih_d = u(keys[4], (n_hidden, n_class))
    w_hh_d = u(keys[5], (n_hidden, n_hidden))
    b_ih_d = u(keys[6], (n_hidden,))
    b_hh_d = u(keys[7], (n_hidden,))
    w_fc = u(keys[8], (n_class, n_hidden))
    b_fc = u(keys[9], (n_class,))

    # ---- packed kernel operands (pre-transposed for x @ W) ----
    w_ih_t = jnp.zeros((_C_PAD, 2 * n_hidden), jnp.float32)          # [32, 256]
    w_ih_t = w_ih_t.at[:n_class, :n_hidden].set(w_ih_e.T)
    w_ih_t = w_ih_t.at[:n_class, n_hidden:].set(w_ih_d.T)
    w_hh_t = jnp.concatenate([w_hh_e.T, w_hh_d.T], axis=1)           # [128, 256]
    w_fc_t = jnp.zeros((n_hidden, 2 * n_hidden), jnp.float32)        # [128, 256]
    w_fc_t = w_fc_t.at[:, :n_class].set(w_fc.T)                      # lane-padded fc

    w_slab = jnp.concatenate([w_ih_t, w_hh_t, w_fc_t],
                             axis=0).astype(jnp.bfloat16)            # [288, 256]
    assert w_slab.shape == (_W_SLAB_ROWS, 2 * n_hidden)

    b_slab = jnp.zeros((8, 2 * n_hidden), jnp.float32)
    b_slab = b_slab.at[0, :n_hidden].set(b_ih_e + b_hh_e)
    b_slab = b_slab.at[0, n_hidden:].set(b_ih_d + b_hh_d)
    b_slab = b_slab.at[1, :n_class].set(b_fc)

    return {
        # packed kernel operands
        "w_slab": w_slab, "b_slab": b_slab,
        # f32 copies for the plain-JAX reference
        "w_ih_e": w_ih_e.T, "w_ih_d": w_ih_d.T,
        "w_hh_e": w_hh_e.T, "w_hh_d": w_hh_d.T,
        "b_e": (b_ih_e + b_hh_e)[None, :], "b_d": (b_ih_d + b_hh_d)[None, :],
        "w_fc": w_fc.T, "b_fc": b_fc[None, :],
    }


def seq2seq_forward(params, enc_input, enc_h_0, dec_input):
    """Mirrors Seq2Seq.forward.

    enc_input : [B, T_enc, n_class]  (batch-first, like the PyTorch caller)
    enc_h_0   : [1, B, n_hidden]
    dec_input : [B, T_dec, n_class]
    returns   : [T_dec, B, n_class]  (time-major, exactly like the PyTorch module)
    """
    enc_x = jnp.transpose(enc_input, (1, 0, 2)).astype(jnp.float32)  # [T_e, B, C]
    dec_x = jnp.transpose(dec_input, (1, 0, 2)).astype(jnp.float32)  # [T_d, B, C]
    t_enc, batch, _ = enc_x.shape
    t_dec = dec_x.shape[0]
    assert batch <= _B_PAD

    # Stack enc+dec time-major; pad batch -> 8 sublanes and n_class -> 32 lanes
    # so every per-timestep slice inside the kernel is vreg-aligned.
    x_all = jnp.zeros((t_enc + t_dec, _B_PAD, _C_PAD), jnp.float32)
    x_all = x_all.at[:t_enc, :batch, :n_class].set(enc_x)
    x_all = x_all.at[t_enc:, :batch, :n_class].set(dec_x)
    x_all = x_all.reshape((t_enc + t_dec) * _B_PAD, _C_PAD).astype(jnp.bfloat16)

    h0 = jnp.zeros((_B_PAD, n_hidden), jnp.float32)
    h0 = h0.at[:batch, :].set(enc_h_0[0].astype(jnp.float32))

    vmem = functools.partial(pl.BlockSpec, memory_space=pltpu.MemorySpace.VMEM)
    kernel = functools.partial(_seq2seq_kernel, t_enc, t_dec)
    out = pl.pallas_call(
        kernel,
        out_shape=jax.ShapeDtypeStruct((t_dec * _B_PAD, n_hidden), jnp.float32),
        in_specs=[vmem()] * 4,
        out_specs=vmem(),
    )(x_all, h0, params["w_slab"], params["b_slab"])

    # [T_d*8, 128] -> [T_d, 8, 128] -> drop batch + lane padding.
    return out.reshape(t_dec, _B_PAD, n_hidden)[:, :batch, :n_class]


def seq2seq_reference(params, enc_input, enc_h_0, dec_input):
    """Plain-JAX f32 reference (same math) for correctness checking."""
    enc_x = jnp.transpose(enc_input, (1, 0, 2)).astype(jnp.float32)
    dec_x = jnp.transpose(dec_input, (1, 0, 2)).astype(jnp.float32)
    h = enc_h_0[0].astype(jnp.float32)

    def enc_step(h, x_t):
        h = jnp.tanh(x_t @ params["w_ih_e"] + h @ params["w_hh_e"] + params["b_e"])
        return h, None

    h, _ = lax.scan(enc_step, h, enc_x)

    def dec_step(h, x_t):
        h = jnp.tanh(x_t @ params["w_ih_d"] + h @ params["w_hh_d"] + params["b_d"])
        y = h @ params["w_fc"] + params["b_fc"]
        return h, y

    _, ys = lax.scan(dec_step, h, dec_x)
    return ys


if __name__ == "__main__":
    key = jax.random.PRNGKey(0)
    k_params, k_enc, k_dec, k_h0 = jax.random.split(key, 4)

    batch = 2
    t_enc = 6
    t_dec = 6

    params = init_params(k_params)
    # Inputs are one-hot letter encodings in the original script; random dense
    # values exercise identical math.
    enc_input = jax.random.normal(k_enc, (batch, t_enc, n_class), jnp.float32)
    dec_input = jax.random.normal(k_dec, (batch, t_dec, n_class), jnp.float32)
    enc_h_0 = jax.random.normal(k_h0, (1, batch, n_hidden), jnp.float32)

    out = jax.block_until_ready(
        seq2seq_forward(params, enc_input, enc_h_0, dec_input))
    ref = jax.block_until_ready(
        seq2seq_reference(params, enc_input, enc_h_0, dec_input))

    assert out.shape == (t_dec, batch, n_class), out.shape
    max_err = float(jnp.max(jnp.abs(out - ref)))
    # bf16 MXU operands (f32 accumulation) over a 12-step recurrence: allow a
    # slightly looser tolerance than the all-f32 version.
    assert jnp.allclose(out, ref, atol=3e-2, rtol=3e-2), max_err

    print("KERNEL_OK")
</pallas_src>

<mosaic_0001>
module attributes {stable_mosaic.version = 11 : i64} {
  func.func @_seq2seq_kernel(%arg0: memref<96x32xbf16, #tpu.memory_space<vmem>>, %arg1: memref<8x128xf32, #tpu.memory_space<vmem>>, %arg2: memref<288x256xbf16, #tpu.memory_space<vmem>>, %arg3: memref<8x256xf32, #tpu.memory_space<vmem>>, %arg4: memref<48x128xf32, #tpu.memory_space<vmem>>) attributes {dimension_semantics = [], scalar_prefetch = 0 : i64, scratch_operands = 0 : i64, tpu.core_type = #tpu.core_type<tc>} {
    %c0 = arith.constant 0 : index
    %c0_0 = arith.constant 0 : index
    %0 = vector.load %arg2[%c0, %c0_0] : memref<288x256xbf16, #tpu.memory_space<vmem>>, vector<32x256xbf16>
    %c32 = arith.constant 32 : index
    %c0_1 = arith.constant 0 : index
    %1 = vector.load %arg2[%c32, %c0_1] : memref<288x256xbf16, #tpu.memory_space<vmem>>, vector<128x128xbf16>
    %c32_2 = arith.constant 32 : index
    %c128 = arith.constant 128 : index
    %2 = vector.load %arg2[%c32_2, %c128] : memref<288x256xbf16, #tpu.memory_space<vmem>>, vector<128x128xbf16>
    %c160 = arith.constant 160 : index
    %c0_3 = arith.constant 0 : index
    %3 = vector.load %arg2[%c160, %c0_3] : memref<288x256xbf16, #tpu.memory_space<vmem>>, vector<128x128xbf16>
    %c0_4 = arith.constant 0 : index
    %c0_5 = arith.constant 0 : index
    %4 = vector.load %arg3[%c0_4, %c0_5] : memref<8x256xf32, #tpu.memory_space<vmem>>, vector<1x256xf32>
    %c1 = arith.constant 1 : index
    %c0_6 = arith.constant 0 : index
    %5 = vector.load %arg3[%c1, %c0_6] : memref<8x256xf32, #tpu.memory_space<vmem>>, vector<1x128xf32>
    %c0_7 = arith.constant 0 : index
    %c0_8 = arith.constant 0 : index
    %6 = vector.load %arg0[%c0_7, %c0_8] : memref<96x32xbf16, #tpu.memory_space<vmem>>, vector<96x32xbf16>
    %cst = arith.constant dense<0.000000e+00> : vector<96x256xf32>
    %7 = tpu.matmul %6, %0, %cst {dimension_numbers = #tpu.dot_dimension_numbers<[1], [0], [0], [1], [0, 0, 1, 1], [], []>} : vector<96x32xbf16>, vector<32x256xbf16>, vector<96x256xf32> -> vector<96x256xf32>
    %8 = vector.broadcast %4 : vector<1x256xf32> to vector<96x256xf32>
    %9 = arith.addf %7, %8 : vector<96x256xf32>
    %10 = vector.extract_strided_slice %9 {offsets = [0, 0], sizes = [96, 128], strides = [1, 1]} : vector<96x256xf32> to vector<96x128xf32>
    %11 = vector.extract_strided_slice %9 {offsets = [0, 128], sizes = [96, 128], strides = [1, 1]} : vector<96x256xf32> to vector<96x128xf32>
    %c0_9 = arith.constant 0 : index
    %c0_10 = arith.constant 0 : index
    %12 = vector.load %arg1[%c0_9, %c0_10] : memref<8x128xf32, #tpu.memory_space<vmem>>, vector<8x128xf32>
    %13 = arith.truncf %12 : vector<8x128xf32> to vector<8x128xbf16>
    %cst_11 = arith.constant dense<0.000000e+00> : vector<8x128xf32>
    %14 = tpu.matmul %13, %1, %cst_11 {dimension_numbers = #tpu.dot_dimension_numbers<[1], [0], [0], [1], [0, 0, 1, 1], [], []>} : vector<8x128xbf16>, vector<128x128xbf16>, vector<8x128xf32> -> vector<8x128xf32>
    %15 = vector.extract_strided_slice %10 {offsets = [0, 0], sizes = [8, 128], strides = [1, 1]} : vector<96x128xf32> to vector<8x128xf32>
    %16 = arith.addf %15, %14 : vector<8x128xf32>
    %17 = math.tanh %16 : vector<8x128xf32>
    %18 = arith.truncf %17 : vector<8x128xf32> to vector<8x128xbf16>
    %cst_12 = arith.constant dense<0.000000e+00> : vector<8x128xf32>
    %19 = tpu.matmul %18, %1, %cst_12 {dimension_numbers = #tpu.dot_dimension_numbers<[1], [0], [0], [1], [0, 0, 1, 1], [], []>} : vector<8x128xbf16>, vector<128x128xbf16>, vector<8x128xf32> -> vector<8x128xf32>
    %20 = vector.extract_strided_slice %10 {offsets = [8, 0], sizes = [8, 128], strides = [1, 1]} : vector<96x128xf32> to vector<8x128xf32>
    %21 = arith.addf %20, %19 : vector<8x128xf32>
    %22 = math.tanh %21 : vector<8x128xf32>
    %23 = arith.truncf %22 : vector<8x128xf32> to vector<8x128xbf16>
    %cst_13 = arith.constant dense<0.000000e+00> : vector<8x128xf32>
    %24 = tpu.matmul %23, %1, %cst_13 {dimension_numbers = #tpu.dot_dimension_numbers<[1], [0], [0], [1], [0, 0, 1, 1], [], []>} : vector<8x128xbf16>, vector<128x128xbf16>, vector<8x128xf32> -> vector<8x128xf32>
    %25 = vector.extract_strided_slice %10 {offsets = [16, 0], sizes = [8, 128], strides = [1, 1]} : vector<96x128xf32> to vector<8x128xf32>
    %26 = arith.addf %25, %24 : vector<8x128xf32>
    %27 = math.tanh %26 : vector<8x128xf32>
    %28 = arith.truncf %27 : vector<8x128xf32> to vector<8x128xbf16>
    %cst_14 = arith.constant dense<0.000000e+00> : vector<8x128xf32>
    %29 = tpu.matmul %28, %1, %cst_14 {dimension_numbers = #tpu.dot_dimension_numbers<[1], [0], [0], [1], [0, 0, 1, 1], [], []>} : vector<8x128xbf16>, vector<128x128xbf16>, vector<8x128xf32> -> vector<8x128xf32>
    %30 = vector.extract_strided_slice %10 {offsets = [24, 0], sizes = [8, 128], strides = [1, 1]} : vector<96x128xf32> to vector<8x128xf32>
    %31 = arith.addf %30, %29 : vector<8x128xf32>
    %32 = math.tanh %31 : vector<8x128xf32>
    %33 = arith.truncf %32 : vector<8x128xf32> to vector<8x128xbf16>
    %cst_15 = arith.constant dense<0.000000e+00> : vector<8x128xf32>
    %34 = tpu.matmul %33, %1, %cst_15 {dimension_numbers = #tpu.dot_dimension_numbers<[1], [0], [0], [1], [0, 0, 1, 1], [], []>} : vector<8x128xbf16>, vector<128x128xbf16>, vector<8x128xf32> -> vector<8x128xf32>
    %35 = vector.extract_strided_slice %10 {offsets = [32, 0], sizes = [8, 128], strides = [1, 1]} : vector<96x128xf32> to vector<8x128xf32>
    %36 = arith.addf %35, %34 : vector<8x128xf32>
    %37 = math.tanh %36 : vector<8x128xf32>
    %38 = arith.truncf %37 : vector<8x128xf32> to vector<8x128xbf16>
    %cst_16 = arith.constant dense<0.000000e+00> : vector<8x128xf32>
    %39 = tpu.matmul %38, %1, %cst_16 {dimension_numbers = #tpu.dot_dimension_numbers<[1], [0], [0], [1], [0, 0, 1, 1], [], []>} : vector<8x128xbf16>, vector<128x128xbf16>, vector<8x128xf32> -> vector<8x128xf32>
    %40 = vector.extract_strided_slice %10 {offsets = [40, 0], sizes = [8, 128], strides = [1, 1]} : vector<96x128xf32> to vector<8x128xf32>
    %41 = arith.addf %40, %39 : vector<8x128xf32>
    %42 = math.tanh %41 : vector<8x128xf32>
    %43 = arith.truncf %42 : vector<8x128xf32> to vector<8x128xbf16>
    %cst_17 = arith.constant dense<0.000000e+00> : vector<8x128xf32>
    %44 = tpu.matmul %43, %2, %cst_17 {dimension_numbers = #tpu.dot_dimension_numbers<[1], [0], [0], [1], [0, 0, 1, 1], [], []>} : vector<8x128xbf16>, vector<128x128xbf16>, vector<8x128xf32> -> vector<8x128xf32>
    %45 = vector.extract_strided_slice %11 {offsets = [48, 0], sizes = [8, 128], strides = [1, 1]} : vector<96x128xf32> to vector<8x128xf32>
    %46 = arith.addf %45, %44 : vector<8x128xf32>
    %47 = math.tanh %46 : vector<8x128xf32>
    %48 = arith.truncf %47 : vector<8x128xf32> to vector<8x128xbf16>
    %cst_18 = arith.constant dense<0.000000e+00> : vector<8x128xf32>
    %49 = tpu.matmul %48, %2, %cst_18 {dimension_numbers = #tpu.dot_dimension_numbers<[1], [0], [0], [1], [0, 0, 1, 1], [], []>} : vector<8x128xbf16>, vector<128x128xbf16>, vector<8x128xf32> -> vector<8x128xf32>
    %50 = vector.extract_strided_slice %11 {offsets = [56, 0], sizes = [8, 128], strides = [1, 1]} : vector<96x128xf32> to vector<8x128xf32>
    %51 = arith.addf %50, %49 : vector<8x128xf32>
    %52 = math.tanh %51 : vector<8x128xf32>
    %53 = arith.truncf %52 : vector<8x128xf32> to vector<8x128xbf16>
    %cst_19 = arith.constant dense<0.000000e+00> : vector<8x128xf32>
    %54 = tpu.matmul %53, %2, %cst_19 {dimension_numbers = #tpu.dot_dimension_numbers<[1], [0], [0], [1], [0, 0, 1, 1], [], []>} : vector<8x128xbf16>, vector<128x128xbf16>, vector<8x128xf32> -> vector<8x128xf32>
    %55 = vector.extract_strided_slice %11 {offsets = [64, 0], sizes = [8, 128], strides = [1, 1]} : vector<96x128xf32> to vector<8x128xf32>
    %56 = arith.addf %55, %54 : vector<8x128xf32>
    %57 = math.tanh %56 : vector<8x128xf32>
    %58 = arith.truncf %57 : vector<8x128xf32> to vector<8x128xbf16>
    %cst_20 = arith.constant dense<0.000000e+00> : vector<8x128xf32>
    %59 = tpu.matmul %58, %2, %cst_20 {dimension_numbers = #tpu.dot_dimension_numbers<[1], [0], [0], [1], [0, 0, 1, 1], [], []>} : vector<8x128xbf16>, vector<128x128xbf16>, vector<8x128xf32> -> vector<8x128xf32>
    %60 = vector.extract_strided_slice %11 {offsets = [72, 0], sizes = [8, 128], strides = [1, 1]} : vector<96x128xf32> to vector<8x128xf32>
    %61 = arith.addf %60, %59 : vector<8x128xf32>
    %62 = math.tanh %61 : vector<8x128xf32>
    %63 = arith.truncf %62 : vector<8x128xf32> to vector<8x128xbf16>
    %cst_21 = arith.constant dense<0.000000e+00> : vector<8x128xf32>
    %64 = tpu.matmul %63, %2, %cst_21 {dimension_numbers = #tpu.dot_dimension_numbers<[1], [0], [0], [1], [0, 0, 1, 1], [], []>} : vector<8x128xbf16>, vector<128x128xbf16>, vector<8x128xf32> -> vector<8x128xf32>
    %65 = vector.extract_strided_slice %11 {offsets = [80, 0], sizes = [8, 128], strides = [1, 1]} : vector<96x128xf32> to vector<8x128xf32>
    %66 = arith.addf %65, %64 : vector<8x128xf32>
    %67 = math.tanh %66 : vector<8x128xf32>
    %68 = arith.truncf %67 : vector<8x128xf32> to vector<8x128xbf16>
    %cst_22 = arith.constant dense<0.000000e+00> : vector<8x128xf32>
    %69 = tpu.matmul %68, %2, %cst_22 {dimension_numbers = #tpu.dot_dimension_numbers<[1], [0], [0], [1], [0, 0, 1, 1], [], []>} : vector<8x128xbf16>, vector<128x128xbf16>, vector<8x128xf32> -> vector<8x128xf32>
    %70 = vector.extract_strided_slice %11 {offsets = [88, 0], sizes = [8, 128], strides = [1, 1]} : vector<96x128xf32> to vector<8x128xf32>
    %71 = arith.addf %70, %69 : vector<8x128xf32>
    %72 = math.tanh %71 : vector<8x128xf32>
    %73 = tpu.concatenate %47, %52, %57, %62, %67, %72 in 0 : vector<8x128xf32>, vector<8x128xf32>, vector<8x128xf32>, vector<8x128xf32>, vector<8x128xf32>, vector<8x128xf32> -> vector<48x128xf32>
    %74 = arith.truncf %73 : vector<48x128xf32> to vector<48x128xbf16>
    %cst_23 = arith.constant dense<0.000000e+00> : vector<48x128xf32>
    %75 = tpu.matmul %74, %3, %cst_23 {dimension_numbers = #tpu.dot_dimension_numbers<[1], [0], [0], [1], [0, 0, 1, 1], [], []>} : vector<48x128xbf16>, vector<128x128xbf16>, vector<48x128xf32> -> vector<48x128xf32>
    %76 = vector.broadcast %5 : vector<1x128xf32> to vector<48x128xf32>
    %77 = arith.addf %75, %76 : vector<48x128xf32>
    %c0_24 = arith.constant 0 : index
    %c0_25 = arith.constant 0 : index
    %78 = vector.load %arg4[%c0_24, %c0_25] : memref<48x128xf32, #tpu.memory_space<vmem>>, vector<48x128xf32>
    tpu.vector_store %arg4[%c0_24, %c0_25], %77 {strides = array<i32>} : memref<48x128xf32, #tpu.memory_space<vmem>>, vector<48x128xf32>,
    return
  }
}

</mosaic_0001>

<llo_original>
// kernel: tpu_custom_call.1
$region0: #{tpu_custom_call.1}
  #allocation0 [shape = 'u32[]', space=smem, size = 0x4, offset = 0x4, fixed_abs, tag = 'smem constant byte address 0x4 - core index']
  #allocation1 [shape = 'u32[144,128]{1,0:T(1,128)}', space=vmem, size = 0x12000, scoped, tag = 'internal scratch']
  %s0 = inlined_call_operand.vmem [shape: bf16[96,32], index: 0, kind: input, shape index: {}]
  %s1 = inlined_call_operand.vmem [shape: f32[8,128], index: 1, kind: input, shape index: {}]
  %s2 = inlined_call_operand.hbm [shape: bf16[288,256], index: 2, kind: input, shape index: {}]
  %s3 = inlined_call_operand.vmem [shape: f32[8,256], index: 3, kind: input, shape index: {}]
  %s4 = inlined_call_operand.hbm [shape: f32[48,128], index: 4, kind: output, shape index: {}]
  %s5 = sld [smem:[#allocation0]]
  $region30: #{tpu_custom_call.1} parent=0
    _
  %s7 = ssub.s32 1, %s5
  %s8 = scalar_select 0, %s7, %s5
  $region1: #{tpu_custom_call.1} parent=0
    #allocation2 [shape = 'u8[147456]{0}', space=vmem, size = 0x24000, scoped, tag = 'input window, operand 2, single buffered']
    #allocation3 [shape = 's32[1]{0}', space=sflag, size = 0x4, scoped, tag = 'scoped memory for tpu_custom_call.1']
    #allocation4 [shape = 's32[1]{0}', space=sflag, size = 0x4, scoped, tag = 'scoped memory for tpu_custom_call.1']
    #allocation5 [shape = 'u8[24576]{0}', space=vmem, size = 0x6000, scoped, tag = 'output window, operand 0, single buffered']
    %9 = vsyncpa [#allocation3], 0
    %10 = vsyncpa [#allocation4], 0
    // Predicated region
    $region2: #{tpu_custom_call.1} parent=1 // pred_check
      _
    $region3: #{tpu_custom_call.1} parent=1 // pred_check_branch
      %12 = sbr.rel (0) target = $region5
    $region4: #{tpu_custom_call.1} parent=1 // pred_region
      _
    $region5: #{tpu_custom_call.1} parent=1 // pred_fallthru
      _
    // Predicated region
    $region6: #{tpu_custom_call.1} parent=1 // pred_check
      _
    $region7: #{tpu_custom_call.1} parent=1 // pred_check_branch
      %14 = sbr.rel (0) target = $region9
    $region8: #{tpu_custom_call.1} parent=1 // pred_region
      _
    $region9: #{tpu_custom_call.1} parent=1 // pred_fallthru
      _
    // Predicated region
    $region10: #{tpu_custom_call.1} parent=1 // pred_check
      _
    $region11: #{tpu_custom_call.1} parent=1 // pred_check_branch
      %16 = sbr.rel (0) target = $region13
    $region12: #{tpu_custom_call.1} parent=1 // pred_region
      %s18 = ssub.s32 4608, 4608
      %19 = vsyncadd [#allocation3], %s18
      %s20 = sshll.u32 [#allocation2], 4
      %s21 = int_to_ptr.vmem [resolvable:$true] %s20
      %26 = dma.hbm_to_vmem [thread:$0]  %s2, 4608, %s21, [#allocation3], 128, 128, 8
    $region13: #{tpu_custom_call.1} parent=1 // pred_fallthru
      _
    // Predicated region
    $region14: #{tpu_custom_call.1} parent=1 // pred_check
      _
    $region15: #{tpu_custom_call.1} parent=1 // pred_check_branch
      %28 = sbr.rel (0) target = $region17
    $region16: #{tpu_custom_call.1} parent=1 // pred_region
      _
    $region17: #{tpu_custom_call.1} parent=1 // pred_fallthru
      _
    // Predicated region
    $region18: #{tpu_custom_call.1} parent=1 // pred_check
      _
    $region19: #{tpu_custom_call.1} parent=1 // pred_check_branch
      %30 = sbr.rel (0) target = $region21
    $region20: #{tpu_custom_call.1} parent=1 // pred_region
      %31 = dma.done [#allocation3], 4608
    $region21: #{tpu_custom_call.1} parent=1 // pred_fallthru
      _
    %v33 = vld [vmem:[#allocation2] sm:$0xff]
    %v34 = vld [vmem:[#allocation2 + $0x8] sm:$0xff]
    %v35 = vld [vmem:[#allocation2 + $0x10] sm:$0xff]
    %v36 = vld [vmem:[#allocation2 + $0x18] sm:$0xff]
    %v37 = vld [vmem:[#allocation2 + $0x20] sm:$0xf]
    %v38 = vld [vmem:[#allocation2 + $0x28] sm:$0xf]
    %v39 = vld [vmem:[#allocation2 + $0x30] sm:$0xf]
    %v40 = vld [vmem:[#allocation2 + $0x38] sm:$0xf]
    %v41 = vld [vmem:[#allocation2 + $0x40] sm:$0xf]
    %v42 = vld [vmem:[#allocation2 + $0x48] sm:$0xf]
    %v43 = vld [vmem:[#allocation2 + $0x50] sm:$0xf]
    %v44 = vld [vmem:[#allocation2 + $0x58] sm:$0xf]
    %v45 = vld [vmem:[#allocation2 + $0x60] sm:$0xf]
    %v46 = vld [vmem:[#allocation2 + $0x68] sm:$0xf]
    %v47 = vld [vmem:[#allocation2 + $0x70] sm:$0xf]
    %v48 = vld [vmem:[#allocation2 + $0x78] sm:$0xf]
    %v49 = vld [vmem:[#allocation2 + $0x80] sm:$0xf]
    %v50 = vld [vmem:[#allocation2 + $0x88] sm:$0xf]
    %v51 = vld [vmem:[#allocation2 + $0x90] sm:$0xf]
    %v52 = vld [vmem:[#allocation2 + $0x98] sm:$0xf]
    %v53 = vld [vmem:[#allocation2 + $0x24] sm:$0xf]
    %v54 = vld [vmem:[#allocation2 + $0x2c] sm:$0xf]
    %v55 = vld [vmem:[#allocation2 + $0x34] sm:$0xf]
    %v56 = vld [vmem:[#allocation2 + $0x3c] sm:$0xf]
    %v57 = vld [vmem:[#allocation2 + $0x44] sm:$0xf]
    %v58 = vld [vmem:[#allocation2 + $0x4c] sm:$0xf]
    %v59 = vld [vmem:[#allocation2 + $0x54] sm:$0xf]
    %v60 = vld [vmem:[#allocation2 + $0x5c] sm:$0xf]
    %v61 = vld [vmem:[#allocation2 + $0x64] sm:$0xf]
    %v62 = vld [vmem:[#allocation2 + $0x6c] sm:$0xf]
    %v63 = vld [vmem:[#allocation2 + $0x74] sm:$0xf]
    %v64 = vld [vmem:[#allocation2 + $0x7c] sm:$0xf]
    %v65 = vld [vmem:[#allocation2 + $0x84] sm:$0xf]
    %v66 = vld [vmem:[#allocation2 + $0x8c] sm:$0xf]
    %v67 = vld [vmem:[#allocation2 + $0x94] sm:$0xf]
    %v68 = vld [vmem:[#allocation2 + $0x9c] sm:$0xf]
    %v69 = vld [vmem:[#allocation2 + $0xa0] sm:$0xf]
    %v70 = vld [vmem:[#allocation2 + $0xa8] sm:$0xf]
    %v71 = vld [vmem:[#allocation2 + $0xb0] sm:$0xf]
    %v72 = vld [vmem:[#allocation2 + $0xb8] sm:$0xf]
    %v73 = vld [vmem:[#allocation2 + $0xc0] sm:$0xf]
    %v74 = vld [vmem:[#allocation2 + $0xc8] sm:$0xf]
    %v75 = vld [vmem:[#allocation2 + $0xd0] sm:$0xf]
    %v76 = vld [vmem:[#allocation2 + $0xd8] sm:$0xf]
    %v77 = vld [vmem:[#allocation2 + $0xe0] sm:$0xf]
    %v78 = vld [vmem:[#allocation2 + $0xe8] sm:$0xf]
    %v79 = vld [vmem:[#allocation2 + $0xf0] sm:$0xf]
    %v80 = vld [vmem:[#allocation2 + $0xf8] sm:$0xf]
    %v81 = vld [vmem:[#allocation2 + $0x100] sm:$0xf]
    %v82 = vld [vmem:[#allocation2 + $0x108] sm:$0xf]
    %v83 = vld [vmem:[#allocation2 + $0x110] sm:$0xf]
    %v84 = vld [vmem:[#allocation2 + $0x118] sm:$0xf]
    %v85 = vld [vmem:[%s3] ss:$8 sm:$0x3]
    %v86 = vld [vmem:[%s3 + $0x1] ss:$0 sm:$0xff]
    %v87 = vld [vmem:[%s0] sm:$0xf]
    %v88 = vld [vmem:[%s0 + $0x4] sm:$0xf]
    %v89 = vld [vmem:[%s0 + $0x8] sm:$0xf]
    %v90 = vld [vmem:[%s0 + $0xc] sm:$0xf]
    %v91 = vld [vmem:[%s0 + $0x10] sm:$0xf]
    %v92 = vld [vmem:[%s0 + $0x14] sm:$0xf]
    %v93 = vld [vmem:[%s0 + $0x18] sm:$0xf]
    %v94 = vld [vmem:[%s0 + $0x1c] sm:$0xf]
    %v95 = vld [vmem:[%s0 + $0x20] sm:$0xf]
    %v96 = vld [vmem:[%s0 + $0x24] sm:$0xf]
    %v97 = vld [vmem:[%s0 + $0x28] sm:$0xf]
    %v98 = vld [vmem:[%s0 + $0x2c] sm:$0xf]
    %v100 = vlaneseq
    %v101 = vshrl.u32 %v100, 7
    %v102 = vsub.s32 0, %v101
    %v103 = vrot.slane %v85, %v102
    %v104 = vlaneseq
    %v105 = vshrl.u32 %v104, 7
    %v106 = vsub.s32 1, %v105
    %v107 = vrot.slane %v85, %v106
    %v122 = vunpack.c.l.b16 %v87
    %v123 = vunpack.c.l.b16 %v88
    %v124 = vunpack.c.l.b16 %v89
    %v125 = vunpack.c.l.b16 %v90
    %v126 = vunpack.c.l.b16 %v91
    %v127 = vunpack.c.l.b16 %v92
    %v128 = vunpack.c.l.b16 %v93
    %v129 = vunpack.c.l.b16 %v94
    %v130 = vunpack.c.l.b16 %v95
    %v131 = vunpack.c.l.b16 %v96
    %v132 = vunpack.c.l.b16 %v97
    %v133 = vunpack.c.l.b16 %v98
    %v134 = vpack.c.b16 %v123, %v122
    %v135 = vpack.c.b16 %v125, %v124
    %v136 = vpack.c.b16 %v127, %v126
    %v137 = vpack.c.b16 %v129, %v128
    %v138 = vpack.c.b16 %v131, %v130
    %v139 = vpack.c.b16 %v133, %v132
    %v144 = vunpack.c.l.b16 %v33
    %v145 = vunpack.c.h.b16 %v33
    %v146 = vunpack.c.l.b16 %v34
    %v147 = vunpack.c.h.b16 %v34
    %v148 = vunpack.c.l.b16 %v35
    %v149 = vunpack.c.h.b16 %v35
    %v150 = vunpack.c.l.b16 %v36
    %v151 = vunpack.c.h.b16 %v36
    %v152 = vpack.c.b16 %v146, %v144
    %v153 = vpack.c.b16 %v147, %v145
    %v154 = vpack.c.b16 %v150, %v148
    %v155 = vpack.c.b16 %v151, %v149
    %vm160 = vcmask 261120
    %v162 = vsel %vm160, %v134, 0
    %v165 = vsel %vm160, %v135, 0
    %v168 = vsel %vm160, %v136, 0
    %v171 = vsel %vm160, %v137, 0
    %v174 = vsel %vm160, %v138, 0
    %v177 = vsel %vm160, %v139, 0
    %179 = vmatprep.subr.bf16.mxu0 0
    %180 = vmatpush1.bf16.msra.mxu0 0
    %181 = vmatprep.subr.bf16.mxu0 0
    %182 = vmatpush1.bf16.msra.mxu0 0
    %183 = vmatprep.subr.bf16.mxu0 0
    %184 = vmatpush1.bf16.msra.mxu0 0
    %185 = vmatprep.subr.bf16.mxu0 0
    %186 = vmatpush1.bf16.msra.mxu0 0
    %187 = vmatprep.subr.bf16.mxu0 0
    %188 = vmatpush1.bf16.msra.mxu0 0
    %189 = vmatprep.subr.bf16.mxu0 0
    %190 = vmatpush1.bf16.msra.mxu0 0
    %191 = vmatprep.subr.bf16.mxu0 %v155
    %192 = vmatpush1.bf16.msra.mxu0 %v154
    %193 = vmatprep.subr.bf16.mxu0 %v153
    %194 = vmatpush1.bf16.msra.mxu0 %v152
    %195 = vmatprep.subr.bf16.mxu0 0
    %196 = vmatpush2.bf16.msra.mxu0 0
    %197 = vmatprep.subr.bf16.mxu0 0
    %198 = vmatpush2.bf16.msra.mxu0 0
    %199 = vmatprep.subr.bf16.mxu0 0
    %200 = vmatpush2.bf16.msra.mxu0 0
    %201 = vmatprep.subr.bf16.mxu0 0
    %202 = vmatpush2.bf16.msra.mxu0 0
    %203 = vmatprep.subr.bf16.mxu0 0
    %204 = vmatpush2.bf16.msra.mxu0 0
    %205 = vmatprep.subr.bf16.mxu0 0
    %206 = vmatpush2.bf16.msra.mxu0 0
    %207 = vmatprep.subr.bf16.mxu0 0
    %208 = vmatpush2.bf16.msra.mxu0 0
    %209 = vmatprep.subr.bf16.mxu0 0
    %210 = vmatpush2.bf16.msra.mxu0 0
    %211 = vmatprep.mubr.bf16.mxu0 0
    %212 = vmatmul.mubr.bf16.gmra.mxu0 %v162
    %v213 = vpop.f32.mrf.mxu0
    %v214 = vadd.f32 %v103, %v213
    %v215 = vpop.f32.mrf.mxu0
    %v216 = vpop.f32.mrf.mxu0
    %v217 = vadd.f32 %v103, %v216
    %v218 = vpop.f32.mrf.mxu0
    %219 = vmatprep.mubr.bf16.mxu0 0
    %220 = vmatmul.mubr.bf16.gmra.mxu0 %v165
    %v221 = vpop.f32.mrf.mxu0
    %v222 = vadd.f32 %v103, %v221
    %v223 = vpop.f32.mrf.mxu0
    %v224 = vpop.f32.mrf.mxu0
    %v225 = vadd.f32 %v103, %v224
    %v226 = vpop.f32.mrf.mxu0
    %227 = vmatprep.mubr.bf16.mxu0 0
    %228 = vmatmul.mubr.bf16.gmra.mxu0 %v168
    %v229 = vpop.f32.mrf.mxu0
    %v230 = vadd.f32 %v103, %v229
    %v231 = vpop.f32.mrf.mxu0
    %v232 = vpop.f32.mrf.mxu0
    %v233 = vadd.f32 %v103, %v232
    %v234 = vpop.f32.mrf.mxu0
    %235 = vmatprep.mubr.bf16.mxu0 0
    %236 = vmatmul.mubr.bf16.gmra.mxu0 %v171
    %v237 = vpop.f32.mrf.mxu0
    %v238 = vpop.f32.mrf.mxu0
    %v239 = vadd.f32 %v107, %v238
    %v240 = vpop.f32.mrf.mxu0
    %v241 = vpop.f32.mrf.mxu0
    %v242 = vadd.f32 %v107, %v241
    %243 = vmatprep.mubr.bf16.mxu0 0
    %244 = vmatmul.mubr.bf16.gmra.mxu0 %v174
    %v245 = vpop.f32.mrf.mxu0
    %v246 = vpop.f32.mrf.mxu0
    %v247 = vadd.f32 %v107, %v246
    %v248 = vpop.f32.mrf.mxu0
    %v249 = vpop.f32.mrf.mxu0
    %v250 = vadd.f32 %v107, %v249
    %251 = vmatprep.mubr.bf16.mxu0 0
    %252 = vmatmul.mubr.bf16.gmra.mxu0 %v177
    %v253 = vpop.f32.mrf.mxu0
    %v254 = vpop.f32.mrf.mxu0
    %v255 = vadd.f32 %v107, %v254
    %v256 = vpop.f32.mrf.mxu0
    %v257 = vpop.f32.mrf.mxu0
    %v258 = vadd.f32 %v107, %v257
    %259 = vdwg.mxu0
    %v260 = vld [vmem:[%s1] sm:$0xff]
    %v261 = vpack.c.bf16 %v260, %v260
    %v278 = vunpack.c.l.b16 %v37
    %v279 = vunpack.c.l.b16 %v38
    %v280 = vunpack.c.l.b16 %v39
    %v281 = vunpack.c.l.b16 %v40
    %v282 = vunpack.c.l.b16 %v41
    %v283 = vunpack.c.l.b16 %v42
    %v284 = vunpack.c.l.b16 %v43
    %v285 = vunpack.c.l.b16 %v44
    %v286 = vunpack.c.l.b16 %v45
    %v287 = vunpack.c.l.b16 %v46
    %v288 = vunpack.c.l.b16 %v47
    %v289 = vunpack.c.l.b16 %v48
    %v290 = vunpack.c.l.b16 %v49
    %v291 = vunpack.c.l.b16 %v50
    %v292 = vunpack.c.l.b16 %v51
    %v293 = vunpack.c.l.b16 %v52
    %v294 = vpack.c.b16 %v279, %v278
    %v295 = vpack.c.b16 %v281, %v280
    %v296 = vpack.c.b16 %v283, %v282
    %v297 = vpack.c.b16 %v285, %v284
    %v298 = vpack.c.b16 %v287, %v286
    %v299 = vpack.c.b16 %v289, %v288
    %v300 = vpack.c.b16 %v291, %v290
    %v301 = vpack.c.b16 %v293, %v292
    %310 = vmatprep.subr.bf16.mxu0 0
    %311 = vmatpush1.bf16.msra.mxu0 %v301
    %312 = vmatprep.subr.bf16.mxu0 0
    %313 = vmatpush1.bf16.msra.mxu0 %v300
    %314 = vmatprep.subr.bf16.mxu0 0
    %315 = vmatpush1.bf16.msra.mxu0 %v299
    %316 = vmatprep.subr.bf16.mxu0 0
    %317 = vmatpush1.bf16.msra.mxu0 %v298
    %318 = vmatprep.subr.bf16.mxu0 0
    %319 = vmatpush1.bf16.msra.mxu0 %v297
    %320 = vmatprep.subr.bf16.mxu0 0
    %321 = vmatpush1.bf16.msra.mxu0 %v296
    %322 = vmatprep.subr.bf16.mxu0 0
    %323 = vmatpush1.bf16.msra.mxu0 %v295
    %324 = vmatprep.subr.bf16.mxu0 0
    %325 = vmatpush1.bf16.msra.mxu0 %v294
    %326 = vmatprep.subr.bf16.mxu0 0
    %327 = vmatpush2.bf16.msra.mxu0 0
    %328 = vmatprep.subr.bf16.mxu0 0
    %329 = vmatpush2.bf16.msra.mxu0 0
    %330 = vmatprep.subr.bf16.mxu0 0
    %331 = vmatpush2.bf16.msra.mxu0 0
    %332 = vmatprep.subr.bf16.mxu0 0
    %333 = vmatpush2.bf16.msra.mxu0 0
    %334 = vmatprep.subr.bf16.mxu0 0
    %335 = vmatpush2.bf16.msra.mxu0 0
    %336 = vmatprep.subr.bf16.mxu0 0
    %337 = vmatpush2.bf16.msra.mxu0 0
    %338 = vmatprep.subr.bf16.mxu0 0
    %339 = vmatpush2.bf16.msra.mxu0 0
    %340 = vmatprep.subr.bf16.mxu0 0
    %341 = vmatpush2.bf16.msra.mxu0 0
    %342 = vmatprep.mubr.bf16.mxu0 0
    %343 = vmatmul.mubr.bf16.gmra.mxu0 %v261
    %v344 = vpop.f32.mrf.mxu0
    %v345 = vadd.f32 0.0, %v344
    %v346 = vpop.f32.mrf.mxu0
    %v347 = vpop.f32.mrf.mxu0
    %v348 = vpop.f32.mrf.mxu0
    %349 = vdwg.mxu0
    %v350 = vadd.f32 %v214, %v345
    %v351 = vtanh.pop %v350
    %v352 = vpack.c.bf16 %v351, %v351
    %353 = vmatprep.subr.bf16.mxu0 0
    %354 = vmatpush1.bf16.msra.mxu0 %v301
    %355 = vmatprep.subr.bf16.mxu0 0
    %356 = vmatpush1.bf16.msra.mxu0 %v300
    %357 = vmatprep.subr.bf16.mxu0 0
    %358 = vmatpush1.bf16.msra.mxu0 %v299
    %359 = vmatprep.subr.bf16.mxu0 0
    %360 = vmatpush1.bf16.msra.mxu0 %v298
    %361 = vmatprep.subr.bf16.mxu0 0
    %362 = vmatpush1.bf16.msra.mxu0 %v297
    %363 = vmatprep.subr.bf16.mxu0 0
    %364 = vmatpush1.bf16.msra.mxu0 %v296
    %365 = vmatprep.subr.bf16.mxu0 0
    %366 = vmatpush1.bf16.msra.mxu0 %v295
    %367 = vmatprep.subr.bf16.mxu0 0
    %368 = vmatpush1.bf16.msra.mxu0 %v294
    %369 = vmatprep.subr.bf16.mxu0 0
    %370 = vmatpush2.bf16.msra.mxu0 0
    %371 = vmatprep.subr.bf16.mxu0 0
    %372 = vmatpush2.bf16.msra.mxu0 0
    %373 = vmatprep.subr.bf16.mxu0 0
    %374 = vmatpush2.bf16.msra.mxu0 0
    %375 = vmatprep.subr.bf16.mxu0 0
    %376 = vmatpush2.bf16.msra.mxu0 0
    %377 = vmatprep.subr.bf16.mxu0 0
    %378 = vmatpush2.bf16.msra.mxu0 0
    %379 = vmatprep.subr.bf16.mxu0 0
    %380 = vmatpush2.bf16.msra.mxu0 0
    %381 = vmatprep.subr.bf16.mxu0 0
    %382 = vmatpush2.bf16.msra.mxu0 0
    %383 = vmatprep.subr.bf16.mxu0 0
    %384 = vmatpush2.bf16.msra.mxu0 0
    %385 = vmatprep.mubr.bf16.mxu0 0
    %386 = vmatmul.mubr.bf16.gmra.mxu0 %v352
    %v387 = vpop.f32.mrf.mxu0
    %v388 = vadd.f32 0.0, %v387
    %v389 = vpop.f32.mrf.mxu0
    %v390 = vpop.f32.mrf.mxu0
    %v391 = vpop.f32.mrf.mxu0
    %392 = vdwg.mxu0
    %v393 = vadd.f32 %v217, %v388
    %v394 = vtanh.pop %v393
    %v395 = vpack.c.bf16 %v394, %v394
    %396 = vmatprep.subr.bf16.mxu0 0
    %397 = vmatpush1.bf16.msra.mxu0 %v301
    %398 = vmatprep.subr.bf16.mxu0 0
    %399 = vmatpush1.bf16.msra.mxu0 %v300
    %400 = vmatprep.subr.bf16.mxu0 0
    %401 = vmatpush1.bf16.msra.mxu0 %v299
    %402 = vmatprep.subr.bf16.mxu0 0
    %403 = vmatpush1.bf16.msra.mxu0 %v298
    %404 = vmatprep.subr.bf16.mxu0 0
    %405 = vmatpush1.bf16.msra.mxu0 %v297
    %406 = vmatprep.subr.bf16.mxu0 0
    %407 = vmatpush1.bf16.msra.mxu0 %v296
    %408 = vmatprep.subr.bf16.mxu0 0
    %409 = vmatpush1.bf16.msra.mxu0 %v295
    %410 = vmatprep.subr.bf16.mxu0 0
    %411 = vmatpush1.bf16.msra.mxu0 %v294
    %412 = vmatprep.subr.bf16.mxu0 0
    %413 = vmatpush2.bf16.msra.mxu0 0
    %414 = vmatprep.subr.bf16.mxu0 0
    %415 = vmatpush2.bf16.msra.mxu0 0
    %416 = vmatprep.subr.bf16.mxu0 0
    %417 = vmatpush2.bf16.msra.mxu0 0
    %418 = vmatprep.subr.bf16.mxu0 0
    %419 = vmatpush2.bf16.msra.mxu0 0
    %420 = vmatprep.subr.bf16.mxu0 0
    %421 = vmatpush2.bf16.msra.mxu0 0
    %422 = vmatprep.subr.bf16.mxu0 0
    %423 = vmatpush2.bf16.msra.mxu0 0
    %424 = vmatprep.subr.bf16.mxu0 0
    %425 = vmatpush2.bf16.msra.mxu0 0
    %426 = vmatprep.subr.bf16.mxu0 0
    %427 = vmatpush2.bf16.msra.mxu0 0
    %428 = vmatprep.mubr.bf16.mxu0 0
    %429 = vmatmul.mubr.bf16.gmra.mxu0 %v395
    %v430 = vpop.f32.mrf.mxu0
    %v431 = vadd.f32 0.0, %v430
    %v432 = vpop.f32.mrf.mxu0
    %v433 = vpop.f32.mrf.mxu0
    %v434 = vpop.f32.mrf.mxu0
    %435 = vdwg.mxu0
    %v436 = vadd.f32 %v222, %v431
    %v437 = vtanh.pop %v436
    %v438 = vpack.c.bf16 %v437, %v437
    %439 = vmatprep.subr.bf16.mxu0 0
    %440 = vmatpush1.bf16.msra.mxu0 %v301
    %441 = vmatprep.subr.bf16.mxu0 0
    %442 = vmatpush1.bf16.msra.mxu0 %v300
    %443 = vmatprep.subr.bf16.mxu0 0
    %444 = vmatpush1.bf16.msra.mxu0 %v299
    %445 = vmatprep.subr.bf16.mxu0 0
    %446 = vmatpush1.bf16.msra.mxu0 %v298
    %447 = vmatprep.subr.bf16.mxu0 0
    %448 = vmatpush1.bf16.msra.mxu0 %v297
    %449 = vmatprep.subr.bf16.mxu0 0
    %450 = vmatpush1.bf16.msra.mxu0 %v296
    %451 = vmatprep.subr.bf16.mxu0 0
    %452 = vmatpush1.bf16.msra.mxu0 %v295
    %453 = vmatprep.subr.bf16.mxu0 0
    %454 = vmatpush1.bf16.msra.mxu0 %v294
    %455 = vmatprep.subr.bf16.mxu0 0
    %456 = vmatpush2.bf16.msra.mxu0 0
    %457 = vmatprep.subr.bf16.mxu0 0
    %458 = vmatpush2.bf16.msra.mxu0 0
    %459 = vmatprep.subr.bf16.mxu0 0
    %460 = vmatpush2.bf16.msra.mxu0 0
    %461 = vmatprep.subr.bf16.mxu0 0
    %462 = vmatpush2.bf16.msra.mxu0 0
    %463 = vmatprep.subr.bf16.mxu0 0
    %464 = vmatpush2.bf16.msra.mxu0 0
    %465 = vmatprep.subr.bf16.mxu0 0
    %466 = vmatpush2.bf16.msra.mxu0 0
    %467 = vmatprep.subr.bf16.mxu0 0
    %468 = vmatpush2.bf16.msra.mxu0 0
    %469 = vmatprep.subr.bf16.mxu0 0
    %470 = vmatpush2.bf16.msra.mxu0 0
    %471 = vmatprep.mubr.bf16.mxu0 0
    %472 = vmatmul.mubr.bf16.gmra.mxu0 %v438
    %v473 = vpop.f32.mrf.mxu0
    %v474 = vadd.f32 0.0, %v473
    %v475 = vpop.f32.mrf.mxu0
    %v476 = vpop.f32.mrf.mxu0
    %v477 = vpop.f32.mrf.mxu0
    %478 = vdwg.mxu0
    %v479 = vadd.f32 %v225, %v474
    %v480 = vtanh.pop %v479
    %v481 = vpack.c.bf16 %v480, %v480
    %482 = vmatprep.subr.bf16.mxu0 0
    %483 = vmatpush1.bf16.msra.mxu0 %v301
    %484 = vmatprep.subr.bf16.mxu0 0
    %485 = vmatpush1.bf16.msra.mxu0 %v300
    %486 = vmatprep.subr.bf16.mxu0 0
    %487 = vmatpush1.bf16.msra.mxu0 %v299
    %488 = vmatprep.subr.bf16.mxu0 0
    %489 = vmatpush1.bf16.msra.mxu0 %v298
    %490 = vmatprep.subr.bf16.mxu0 0
    %491 = vmatpush1.bf16.msra.mxu0 %v297
    %492 = vmatprep.subr.bf16.mxu0 0
    %493 = vmatpush1.bf16.msra.mxu0 %v296
    %494 = vmatprep.subr.bf16.mxu0 0
    %495 = vmatpush1.bf16.msra.mxu0 %v295
    %496 = vmatprep.subr.bf16.mxu0 0
    %497 = vmatpush1.bf16.msra.mxu0 %v294
    %498 = vmatprep.subr.bf16.mxu0 0
    %499 = vmatpush2.bf16.msra.mxu0 0
    %500 = vmatprep.subr.bf16.mxu0 0
    %501 = vmatpush2.bf16.msra.mxu0 0
    %502 = vmatprep.subr.bf16.mxu0 0
    %503 = vmatpush2.bf16.msra.mxu0 0
    %504 = vmatprep.subr.bf16.mxu0 0
    %505 = vmatpush2.bf16.msra.mxu0 0
    %506 = vmatprep.subr.bf16.mxu0 0
    %507 = vmatpush2.bf16.msra.mxu0 0
    %508 = vmatprep.subr.bf16.mxu0 0
    %509 = vmatpush2.bf16.msra.mxu0 0
    %510 = vmatprep.subr.bf16.mxu0 0
    %511 = vmatpush2.bf16.msra.mxu0 0
    %512 = vmatprep.subr.bf16.mxu0 0
    %513 = vmatpush2.bf16.msra.mxu0 0
    %514 = vmatprep.mubr.bf16.mxu0 0
    %515 = vmatmul.mubr.bf16.gmra.mxu0 %v481
    %v516 = vpop.f32.mrf.mxu0
    %v517 = vadd.f32 0.0, %v516
    %v518 = vpop.f32.mrf.mxu0
    %v519 = vpop.f32.mrf.mxu0
    %v520 = vpop.f32.mrf.mxu0
    %521 = vdwg.mxu0
    %v522 = vadd.f32 %v230, %v517
    %v523 = vtanh.pop %v522
    %v524 = vpack.c.bf16 %v523, %v523
    %525 = vmatprep.subr.bf16.mxu0 0
    %526 = vmatpush1.bf16.msra.mxu0 %v301
    %527 = vmatprep.subr.bf16.mxu0 0
    %528 = vmatpush1.bf16.msra.mxu0 %v300
    %529 = vmatprep.subr.bf16.mxu0 0
    %530 = vmatpush1.bf16.msra.mxu0 %v299
    %531 = vmatprep.subr.bf16.mxu0 0
    %532 = vmatpush1.bf16.msra.mxu0 %v298
    %533 = vmatprep.subr.bf16.mxu0 0
    %534 = vmatpush1.bf16.msra.mxu0 %v297
    %535 = vmatprep.subr.bf16.mxu0 0
    %536 = vmatpush1.bf16.msra.mxu0 %v296
    %537 = vmatprep.subr.bf16.mxu0 0
    %538 = vmatpush1.bf16.msra.mxu0 %v295
    %539 = vmatprep.subr.bf16.mxu0 0
    %540 = vmatpush1.bf16.msra.mxu0 %v294
    %541 = vmatprep.subr.bf16.mxu0 0
    %542 = vmatpush2.bf16.msra.mxu0 0
    %543 = vmatprep.subr.bf16.mxu0 0
    %544 = vmatpush2.bf16.msra.mxu0 0
    %545 = vmatprep.subr.bf16.mxu0 0
    %546 = vmatpush2.bf16.msra.mxu0 0
    %547 = vmatprep.subr.bf16.mxu0 0
    %548 = vmatpush2.bf16.msra.mxu0 0
    %549 = vmatprep.subr.bf16.mxu0 0
    %550 = vmatpush2.bf16.msra.mxu0 0
    %551 = vmatprep.subr.bf16.mxu0 0
    %552 = vmatpush2.bf16.msra.mxu0 0
    %553 = vmatprep.subr.bf16.mxu0 0
    %554 = vmatpush2.bf16.msra.mxu0 0
    %555 = vmatprep.subr.bf16.mxu0 0
    %556 = vmatpush2.bf16.msra.mxu0 0
    %557 = vmatprep.mubr.bf16.mxu0 0
    %558 = vmatmul.mubr.bf16.gmra.mxu0 %v524
    %v559 = vpop.f32.mrf.mxu0
    %v560 = vadd.f32 0.0, %v559
    %v561 = vpop.f32.mrf.mxu0
    %v562 = vpop.f32.mrf.mxu0
    %v563 = vpop.f32.mrf.mxu0
    %564 = vdwg.mxu0
    %v565 = vadd.f32 %v233, %v560
    %v566 = vtanh.pop %v565
    %v567 = vpack.c.bf16 %v566, %v566
    %v584 = vunpack.c.l.b16 %v53
    %v585 = vunpack.c.l.b16 %v54
    %v586 = vunpack.c.l.b16 %v55
    %v587 = vunpack.c.l.b16 %v56
    %v588 = vunpack.c.l.b16 %v57
    %v589 = vunpack.c.l.b16 %v58
    %v590 = vunpack.c.l.b16 %v59
    %v591 = vunpack.c.l.b16 %v60
    %v592 = vunpack.c.l.b16 %v61
    %v593 = vunpack.c.l.b16 %v62
    %v594 = vunpack.c.l.b16 %v63
    %v595 = vunpack.c.l.b16 %v64
    %v596 = vunpack.c.l.b16 %v65
    %v597 = vunpack.c.l.b16 %v66
    %v598 = vunpack.c.l.b16 %v67
    %v599 = vunpack.c.l.b16 %v68
    %v600 = vpack.c.b16 %v585, %v584
    %v601 = vpack.c.b16 %v587, %v586
    %v602 = vpack.c.b16 %v589, %v588
    %v603 = vpack.c.b16 %v591, %v590
    %v604 = vpack.c.b16 %v593, %v592
    %v605 = vpack.c.b16 %v595, %v594
    %v606 = vpack.c.b16 %v597, %v596
    %v607 = vpack.c.b16 %v599, %v598
    %616 = vmatprep.subr.bf16.mxu0 0
    %617 = vmatpush1.bf16.msra.mxu0 %v607
    %618 = vmatprep.subr.bf16.mxu0 0
    %619 = vmatpush1.bf16.msra.mxu0 %v606
    %620 = vmatprep.subr.bf16.mxu0 0
    %621 = vmatpush1.bf16.msra.mxu0 %v605
    %622 = vmatprep.subr.bf16.mxu0 0
    %623 = vmatpush1.bf16.msra.mxu0 %v604
    %624 = vmatprep.subr.bf16.mxu0 0
    %625 = vmatpush1.bf16.msra.mxu0 %v603
    %626 = vmatprep.subr.bf16.mxu0 0
    %627 = vmatpush1.bf16.msra.mxu0 %v602
    %628 = vmatprep.subr.bf16.mxu0 0
    %629 = vmatpush1.bf16.msra.mxu0 %v601
    %630 = vmatprep.subr.bf16.mxu0 0
    %631 = vmatpush1.bf16.msra.mxu0 %v600
    %632 = vmatprep.subr.bf16.mxu0 0
    %633 = vmatpush2.bf16.msra.mxu0 0
    %634 = vmatprep.subr.bf16.mxu0 0
    %635 = vmatpush2.bf16.msra.mxu0 0
    %636 = vmatprep.subr.bf16.mxu0 0
    %637 = vmatpush2.bf16.msra.mxu0 0
    %638 = vmatprep.subr.bf16.mxu0 0
    %639 = vmatpush2.bf16.msra.mxu0 0
    %640 = vmatprep.subr.bf16.mxu0 0
    %641 = vmatpush2.bf16.msra.mxu0 0
    %642 = vmatprep.subr.bf16.mxu0 0
    %643 = vmatpush2.bf16.msra.mxu0 0
    %644 = vmatprep.subr.bf16.mxu0 0
    %645 = vmatpush2.bf16.msra.mxu0 0
    %646 = vmatprep.subr.bf16.mxu0 0
    %647 = vmatpush2.bf16.msra.mxu0 0
    %648 = vmatprep.mubr.bf16.mxu0 0
    %649 = vmatmul.mubr.bf16.gmra.mxu0 %v567
    %v650 = vpop.f32.mrf.mxu0
    %v651 = vadd.f32 0.0, %v650
    %v652 = vpop.f32.mrf.mxu0
    %v653 = vpop.f32.mrf.mxu0
    %v654 = vpop.f32.mrf.mxu0
    %655 = vdwg.mxu0
    %v656 = vadd.f32 %v239, %v651
    %v657 = vtanh.pop %v656
    %v658 = vpack.c.bf16 %v657, %v657
    %659 = vmatprep.subr.bf16.mxu0 0
    %660 = vmatpush1.bf16.msra.mxu0 %v607
    %661 = vmatprep.subr.bf16.mxu0 0
    %662 = vmatpush1.bf16.msra.mxu0 %v606
    %663 = vmatprep.subr.bf16.mxu0 0
    %664 = vmatpush1.bf16.msra.mxu0 %v605
    %665 = vmatprep.subr.bf16.mxu0 0
    %666 = vmatpush1.bf16.msra.mxu0 %v604
    %667 = vmatprep.subr.bf16.mxu0 0
    %668 = vmatpush1.bf16.msra.mxu0 %v603
    %669 = vmatprep.subr.bf16.mxu0 0
    %670 = vmatpush1.bf16.msra.mxu0 %v602
    %671 = vmatprep.subr.bf16.mxu0 0
    %672 = vmatpush1.bf16.msra.mxu0 %v601
    %673 = vmatprep.subr.bf16.mxu0 0
    %674 = vmatpush1.bf16.msra.mxu0 %v600
    %675 = vmatprep.subr.bf16.mxu0 0
    %676 = vmatpush2.bf16.msra.mxu0 0
    %677 = vmatprep.subr.bf16.mxu0 0
    %678 = vmatpush2.bf16.msra.mxu0 0
    %679 = vmatprep.subr.bf16.mxu0 0
    %680 = vmatpush2.bf16.msra.mxu0 0
    %681 = vmatprep.subr.bf16.mxu0 0
    %682 = vmatpush2.bf16.msra.mxu0 0
    %683 = vmatprep.subr.bf16.mxu0 0
    %684 = vmatpush2.bf16.msra.mxu0 0
    %685 = vmatprep.subr.bf16.mxu0 0
    %686 = vmatpush2.bf16.msra.mxu0 0
    %687 = vmatprep.subr.bf16.mxu0 0
    %688 = vmatpush2.bf16.msra.mxu0 0
    %689 = vmatprep.subr.bf16.mxu0 0
    %690 = vmatpush2.bf16.msra.mxu0 0
    %691 = vmatprep.mubr.bf16.mxu0 0
    %692 = vmatmul.mubr.bf16.gmra.mxu0 %v658
    %v693 = vpop.f32.mrf.mxu0
    %v694 = vadd.f32 0.0, %v693
    %v695 = vpop.f32.mrf.mxu0
    %v696 = vpop.f32.mrf.mxu0
    %v697 = vpop.f32.mrf.mxu0
    %698 = vdwg.mxu0
    %v699 = vadd.f32 %v242, %v694
    %v700 = vtanh.pop %v699
    %v701 = vpack.c.bf16 %v700, %v700
    %702 = vmatprep.subr.bf16.mxu0 0
    %703 = vmatpush1.bf16.msra.mxu0 %v607
    %704 = vmatprep.subr.bf16.mxu0 0
    %705 = vmatpush1.bf16.msra.mxu0 %v606
    %706 = vmatprep.subr.bf16.mxu0 0
    %707 = vmatpush1.bf16.msra.mxu0 %v605
    %708 = vmatprep.subr.bf16.mxu0 0
    %709 = vmatpush1.bf16.msra.mxu0 %v604
    %710 = vmatprep.subr.bf16.mxu0 0
    %711 = vmatpush1.bf16.msra.mxu0 %v603
    %712 = vmatprep.subr.bf16.mxu0 0
    %713 = vmatpush1.bf16.msra.mxu0 %v602
    %714 = vmatprep.subr.bf16.mxu0 0
    %715 = vmatpush1.bf16.msra.mxu0 %v601
    %716 = vmatprep.subr.bf16.mxu0 0
    %717 = vmatpush1.bf16.msra.mxu0 %v600
    %718 = vmatprep.subr.bf16.mxu0 0
    %719 = vmatpush2.bf16.msra.mxu0 0
    %720 = vmatprep.subr.bf16.mxu0 0
    %721 = vmatpush2.bf16.msra.mxu0 0
    %722 = vmatprep.subr.bf16.mxu0 0
    %723 = vmatpush2.bf16.msra.mxu0 0
    %724 = vmatprep.subr.bf16.mxu0 0
    %725 = vmatpush2.bf16.msra.mxu0 0
    %726 = vmatprep.subr.bf16.mxu0 0
    %727 = vmatpush2.bf16.msra.mxu0 0
    %728 = vmatprep.subr.bf16.mxu0 0
    %729 = vmatpush2.bf16.msra.mxu0 0
    %730 = vmatprep.subr.bf16.mxu0 0
    %731 = vmatpush2.bf16.msra.mxu0 0
    %732 = vmatprep.subr.bf16.mxu0 0
    %733 = vmatpush2.bf16.msra.mxu0 0
    %734 = vmatprep.mubr.bf16.mxu0 0
    %735 = vmatmul.mubr.bf16.gmra.mxu0 %v701
    %v736 = vpop.f32.mrf.mxu0
    %v737 = vadd.f32 0.0, %v736
    %v738 = vpop.f32.mrf.mxu0
    %v739 = vpop.f32.mrf.mxu0
    %v740 = vpop.f32.mrf.mxu0
    %741 = vdwg.mxu0
    %v742 = vadd.f32 %v247, %v737
    %v743 = vtanh.pop %v742
    %v744 = vpack.c.bf16 %v743, %v743
    %745 = vmatprep.subr.bf16.mxu0 0
    %746 = vmatpush1.bf16.msra.mxu0 %v607
    %747 = vmatprep.subr.bf16.mxu0 0
    %748 = vmatpush1.bf16.msra.mxu0 %v606
    %749 = vmatprep.subr.bf16.mxu0 0
    %750 = vmatpush1.bf16.msra.mxu0 %v605
    %751 = vmatprep.subr.bf16.mxu0 0
    %752 = vmatpush1.bf16.msra.mxu0 %v604
    %753 = vmatprep.subr.bf16.mxu0 0
    %754 = vmatpush1.bf16.msra.mxu0 %v603
    %755 = vmatprep.subr.bf16.mxu0 0
    %756 = vmatpush1.bf16.msra.mxu0 %v602
    %757 = vmatprep.subr.bf16.mxu0 0
    %758 = vmatpush1.bf16.msra.mxu0 %v601
    %759 = vmatprep.subr.bf16.mxu0 0
    %760 = vmatpush1.bf16.msra.mxu0 %v600
    %761 = vmatprep.subr.bf16.mxu0 0
    %762 = vmatpush2.bf16.msra.mxu0 0
    %763 = vmatprep.subr.bf16.mxu0 0
    %764 = vmatpush2.bf16.msra.mxu0 0
    %765 = vmatprep.subr.bf16.mxu0 0
    %766 = vmatpush2.bf16.msra.mxu0 0
    %767 = vmatprep.subr.bf16.mxu0 0
    %768 = vmatpush2.bf16.msra.mxu0 0
    %769 = vmatprep.subr.bf16.mxu0 0
    %770 = vmatpush2.bf16.msra.mxu0 0
    %771 = vmatprep.subr.bf16.mxu0 0
    %772 = vmatpush2.bf16.msra.mxu0 0
    %773 = vmatprep.subr.bf16.mxu0 0
    %774 = vmatpush2.bf16.msra.mxu0 0
    %775 = vmatprep.subr.bf16.mxu0 0
    %776 = vmatpush2.bf16.msra.mxu0 0
    %777 = vmatprep.mubr.bf16.mxu0 0
    %778 = vmatmul.mubr.bf16.gmra.mxu0 %v744
    %v779 = vpop.f32.mrf.mxu0
    %v780 = vadd.f32 0.0, %v779
    %v781 = vpop.f32.mrf.mxu0
    %v782 = vpop.f32.mrf.mxu0
    %v783 = vpop.f32.mrf.mxu0
    %784 = vdwg.mxu0
    %v785 = vadd.f32 %v250, %v780
    %v786 = vtanh.pop %v785
    %v787 = vpack.c.bf16 %v786, %v786
    %788 = vmatprep.subr.bf16.mxu0 0
    %789 = vmatpush1.bf16.msra.mxu0 %v607
    %790 = vmatprep.subr.bf16.mxu0 0
    %791 = vmatpush1.bf16.msra.mxu0 %v606
    %792 = vmatprep.subr.bf16.mxu0 0
    %793 = vmatpush1.bf16.msra.mxu0 %v605
    %794 = vmatprep.subr.bf16.mxu0 0
    %795 = vmatpush1.bf16.msra.mxu0 %v604
    %796 = vmatprep.subr.bf16.mxu0 0
    %797 = vmatpush1.bf16.msra.mxu0 %v603
    %798 = vmatprep.subr.bf16.mxu0 0
    %799 = vmatpush1.bf16.msra.mxu0 %v602
    %800 = vmatprep.subr.bf16.mxu0 0
    %801 = vmatpush1.bf16.msra.mxu0 %v601
    %802 = vmatprep.subr.bf16.mxu0 0
    %803 = vmatpush1.bf16.msra.mxu0 %v600
    %804 = vmatprep.subr.bf16.mxu0 0
    %805 = vmatpush2.bf16.msra.mxu0 0
    %806 = vmatprep.subr.bf16.mxu0 0
    %807 = vmatpush2.bf16.msra.mxu0 0
    %808 = vmatprep.subr.bf16.mxu0 0
    %809 = vmatpush2.bf16.msra.mxu0 0
    %810 = vmatprep.subr.bf16.mxu0 0
    %811 = vmatpush2.bf16.msra.mxu0 0
    %812 = vmatprep.subr.bf16.mxu0 0
    %813 = vmatpush2.bf16.msra.mxu0 0
    %814 = vmatprep.subr.bf16.mxu0 0
    %815 = vmatpush2.bf16.msra.mxu0 0
    %816 = vmatprep.subr.bf16.mxu0 0
    %817 = vmatpush2.bf16.msra.mxu0 0
    %818 = vmatprep.subr.bf16.mxu0 0
    %819 = vmatpush2.bf16.msra.mxu0 0
    %820 = vmatprep.mubr.bf16.mxu0 0
    %821 = vmatmul.mubr.bf16.gmra.mxu0 %v787
    %v822 = vpop.f32.mrf.mxu0
    %v823 = vadd.f32 0.0, %v822
    %v824 = vpop.f32.mrf.mxu0
    %v825 = vpop.f32.mrf.mxu0
    %v826 = vpop.f32.mrf.mxu0
    %827 = vdwg.mxu0
    %v828 = vadd.f32 %v255, %v823
    %v829 = vtanh.pop %v828
    %v830 = vpack.c.bf16 %v829, %v829
    %831 = vmatprep.subr.bf16.mxu0 0
    %832 = vmatpush1.bf16.msra.mxu0 %v607
    %833 = vmatprep.subr.bf16.mxu0 0
    %834 = vmatpush1.bf16.msra.mxu0 %v606
    %835 = vmatprep.subr.bf16.mxu0 0
    %836 = vmatpush1.bf16.msra.mxu0 %v605
    %837 = vmatprep.subr.bf16.mxu0 0
    %838 = vmatpush1.bf16.msra.mxu0 %v604
    %839 = vmatprep.subr.bf16.mxu0 0
    %840 = vmatpush1.bf16.msra.mxu0 %v603
    %841 = vmatprep.subr.bf16.mxu0 0
    %842 = vmatpush1.bf16.msra.mxu0 %v602
    %843 = vmatprep.subr.bf16.mxu0 0
    %844 = vmatpush1.bf16.msra.mxu0 %v601
    %845 = vmatprep.subr.bf16.mxu0 0
    %846 = vmatpush1.bf16.msra.mxu0 %v600
    %847 = vmatprep.subr.bf16.mxu0 0
    %848 = vmatpush2.bf16.msra.mxu0 0
    %849 = vmatprep.subr.bf16.mxu0 0
    %850 = vmatpush2.bf16.msra.mxu0 0
    %851 = vmatprep.subr.bf16.mxu0 0
    %852 = vmatpush2.bf16.msra.mxu0 0
    %853 = vmatprep.subr.bf16.mxu0 0
    %854 = vmatpush2.bf16.msra.mxu0 0
    %855 = vmatprep.subr.bf16.mxu0 0
    %856 = vmatpush2.bf16.msra.mxu0 0
    %857 = vmatprep.subr.bf16.mxu0 0
    %858 = vmatpush2.bf16.msra.mxu0 0
    %859 = vmatprep.subr.bf16.mxu0 0
    %860 = vmatpush2.bf16.msra.mxu0 0
    %861 = vmatprep.subr.bf16.mxu0 0
    %862 = vmatpush2.bf16.msra.mxu0 0
    %863 = vmatprep.mubr.bf16.mxu0 0
    %864 = vmatmul.mubr.bf16.gmra.mxu0 %v830
    %v865 = vpop.f32.mrf.mxu0
    %v866 = vadd.f32 0.0, %v865
    %v867 = vpop.f32.mrf.mxu0
    %v868 = vpop.f32.mrf.mxu0
    %v869 = vpop.f32.mrf.mxu0
    %870 = vdwg.mxu0
    %v871 = vadd.f32 %v258, %v866
    %v872 = vtanh.pop %v871
    %v873 = vpack.c.bf16 %v700, %v657
    %v874 = vpack.c.bf16 %v786, %v743
    %v875 = vpack.c.bf16 %v872, %v829
    %v892 = vunpack.c.l.b16 %v69
    %v893 = vunpack.c.l.b16 %v70
    %v894 = vunpack.c.l.b16 %v71
    %v895 = vunpack.c.l.b16 %v72
    %v896 = vunpack.c.l.b16 %v73
    %v897 = vunpack.c.l.b16 %v74
    %v898 = vunpack.c.l.b16 %v75
    %v899 = vunpack.c.l.b16 %v76
    %v900 = vunpack.c.l.b16 %v77
    %v901 = vunpack.c.l.b16 %v78
    %v902 = vunpack.c.l.b16 %v79
    %v903 = vunpack.c.l.b16 %v80
    %v904 = vunpack.c.l.b16 %v81
    %v905 = vunpack.c.l.b16 %v82
    %v906 = vunpack.c.l.b16 %v83
    %v907 = vunpack.c.l.b16 %v84
    %v908 = vpack.c.b16 %v893, %v892
    %v909 = vpack.c.b16 %v895, %v894
    %v910 = vpack.c.b16 %v897, %v896
    %v911 = vpack.c.b16 %v899, %v898
    %v912 = vpack.c.b16 %v901, %v900
    %v913 = vpack.c.b16 %v903, %v902
    %v914 = vpack.c.b16 %v905, %v904
    %v915 = vpack.c.b16 %v907, %v906
    %924 = vmatprep.subr.bf16.mxu0 0
    %925 = vmatpush1.bf16.msra.mxu0 %v915
    %926 = vmatprep.subr.bf16.mxu0 0
    %927 = vmatpush1.bf16.msra.mxu0 %v914
    %928 = vmatprep.subr.bf16.mxu0 0
    %929 = vmatpush1.bf16.msra.mxu0 %v913
    %930 = vmatprep.subr.bf16.mxu0 0
    %931 = vmatpush1.bf16.msra.mxu0 %v912
    %932 = vmatprep.subr.bf16.mxu0 0
    %933 = vmatpush1.bf16.msra.mxu0 %v911
    %934 = vmatprep.subr.bf16.mxu0 0
    %935 = vmatpush1.bf16.msra.mxu0 %v910
    %936 = vmatprep.subr.bf16.mxu0 0
    %937 = vmatpush1.bf16.msra.mxu0 %v909
    %938 = vmatprep.subr.bf16.mxu0 0
    %939 = vmatpush1.bf16.msra.mxu0 %v908
    %940 = vmatprep.subr.bf16.mxu0 0
    %941 = vmatpush2.bf16.msra.mxu0 0
    %942 = vmatprep.subr.bf16.mxu0 0
    %943 = vmatpush2.bf16.msra.mxu0 0
    %944 = vmatprep.subr.bf16.mxu0 0
    %945 = vmatpush2.bf16.msra.mxu0 0
    %946 = vmatprep.subr.bf16.mxu0 0
    %947 = vmatpush2.bf16.msra.mxu0 0
    %948 = vmatprep.subr.bf16.mxu0 0
    %949 = vmatpush2.bf16.msra.mxu0 0
    %950 = vmatprep.subr.bf16.mxu0 0
    %951 = vmatpush2.bf16.msra.mxu0 0
    %952 = vmatprep.subr.bf16.mxu0 0
    %953 = vmatpush2.bf16.msra.mxu0 0
    %954 = vmatprep.subr.bf16.mxu0 0
    %955 = vmatpush2.bf16.msra.mxu0 0
    %956 = vmatprep.mubr.bf16.mxu0 0
    %957 = vmatmul.mubr.bf16.gmra.mxu0 %v873
    %v958 = vpop.f32.mrf.mxu0
    %v959 = vadd.f32 %v86, %v958
    %v960 = vpop.f32.mrf.mxu0
    %v961 = vpop.f32.mrf.mxu0
    %v962 = vadd.f32 %v86, %v961
    %v963 = vpop.f32.mrf.mxu0
    %964 = vmatprep.mubr.bf16.mxu0 0
    %965 = vmatmul.mubr.bf16.gmra.mxu0 %v874
    %v966 = vpop.f32.mrf.mxu0
    %v967 = vadd.f32 %v86, %v966
    %v968 = vpop.f32.mrf.mxu0
    %v969 = vpop.f32.mrf.mxu0
    %v970 = vadd.f32 %v86, %v969
    %v971 = vpop.f32.mrf.mxu0
    %972 = vmatprep.mubr.bf16.mxu0 0
    %973 = vmatmul.mubr.bf16.gmra.mxu0 %v875
    %v974 = vpop.f32.mrf.mxu0
    %v975 = vadd.f32 %v86, %v974
    %v976 = vpop.f32.mrf.mxu0
    %v977 = vpop.f32.mrf.mxu0
    %v978 = vadd.f32 %v86, %v977
    %v979 = vpop.f32.mrf.mxu0
    %980 = vdwg.mxu0
    %981 = vst [vmem:[#allocation5] sm:$0xff] %v959
    %982 = vst [vmem:[#allocation5 + $0x8] sm:$0xff] %v962
    %983 = vst [vmem:[#allocation5 + $0x10] sm:$0xff] %v967
    %984 = vst [vmem:[#allocation5 + $0x18] sm:$0xff] %v970
    %985 = vst [vmem:[#allocation5 + $0x20] sm:$0xff] %v975
    %986 = vst [vmem:[#allocation5 + $0x28] sm:$0xff] %v978
    // Predicated region
    $region22: #{tpu_custom_call.1} parent=1 // pred_check
      _
    $region23: #{tpu_custom_call.1} parent=1 // pred_check_branch
      %988 = sbr.rel (0) target = $region25
    $region24: #{tpu_custom_call.1} parent=1 // pred_region
      %s990 = ssub.s32 768, 768
      %991 = vsyncadd [#allocation4], %s990
      %s992 = sshll.u32 [#allocation5], 4
      %s993 = int_to_ptr.vmem [resolvable:$true] %s992
      %998 = dma.vmem_to_hbm [thread:$0]  %s993, 768, %s4, [#allocation4], 128, 128, 8
    $region25: #{tpu_custom_call.1} parent=1 // pred_fallthru
      _
    // Predicated region
    $region26: #{tpu_custom_call.1} parent=1 // pred_check
      _
    $region27: #{tpu_custom_call.1} parent=1 // pred_check_branch
      %1000 = sbr.rel (0) target = $region29
    $region28: #{tpu_custom_call.1} parent=1 // pred_region
      %1001 = dma.done [#allocation4], 768
    $region29: #{tpu_custom_call.1} parent=1 // pred_fallthru
      _
    %1002 = vsyncpa [#allocation3], 1
    %1003 = vsyncpa [#allocation4], 1

</llo_original>
